<compile_context>
chip_gen: v6e
topology: v6e:2x2x1
jax: 0.10.0
libtpu: 0.0.40
codegen_flags: <defaults>
</compile_context>

<pallas_src>
import functools

import jax
import jax.numpy as jnp
from jax.experimental import pallas as pl
from jax.experimental.pallas import tpu as pltpu


def _propagate_kernel(adj_ref, x_ref, accin_ref, next_ref, accout_ref, acc_ref):
    """One (TM, TK) x (TK, E) tile of  next = adj @ x, fused with acc += next.

    adj_ref:    (TM, TK) bf16 adjacency tile   (streamed, double-buffered)
    x_ref:      (TK, E)  bf16 embedding tile   (streamed, double-buffered)
    accin_ref:  (TM, E)  f32 running layer-sum (aliased to accout)
    next_ref:   (TM, E)  bf16 propagated embeddings (next layer's matmul input)
    accout_ref: (TM, E)  f32 updated running layer-sum
    acc_ref:    (TM, E)  f32 MXU accumulator scratch (persists over K axis)
    """
    @pl.when(pl.program_id(1) == 0)
    def _():
        acc_ref[...] = jnp.zeros_like(acc_ref)

    acc_ref[...] += jnp.dot(
        adj_ref[...],
        x_ref[...],
        preferred_element_type=jnp.float32,
    )

    @pl.when(pl.program_id(1) == pl.num_programs(1) - 1)
    def _():
        next_ref[...] = acc_ref[...].astype(next_ref.dtype)
        accout_ref[...] = accin_ref[...] + acc_ref[...]


def _propagate(adj, x, acc, tm, tk):
    """(next, acc + next) where next = adj @ x.

    adj: (M, K) bf16, x: (K, E) bf16, acc: (M, E) f32
    -> next: (M, E) bf16, acc_new: (M, E) f32
    """
    m, k = adj.shape
    e = x.shape[1]
    assert m % tm == 0 and k % tk == 0 and e % 128 == 0

    adj_bytes = m * k * 2                        # bf16, streamed once
    x_bytes = (m // tm) * k * e * 2              # bf16, re-streamed per row tile
    out_bytes = m * e * (2 + 4 + 4)              # next bf16 + acc in/out f32
    cost = pl.CostEstimate(
        flops=2 * m * k * e,
        transcendentals=0,
        bytes_accessed=adj_bytes + x_bytes + out_bytes,
    )

    # Explicit scoped-VMEM budget from the chosen tiles (+headroom), kept
    # below the v7x 64 MiB physical VMEM.
    vmem_limit = int(
        min(
            64 * 1024 * 1024,
            2 * tm * tk * 2       # double-buffered adj tiles (bf16)
            + 2 * tk * e * 2      # double-buffered x tiles (bf16)
            + 2 * tm * e * 4      # double-buffered acc-in tiles (f32)
            + 2 * tm * e * 2      # double-buffered next-out tiles (bf16)
            + 2 * tm * e * 4      # double-buffered acc-out tiles (f32)
            + tm * e * 4          # f32 accumulator scratch
            + 8 * 1024 * 1024,    # compiler scratch headroom
        )
    )

    return pl.pallas_call(
        _propagate_kernel,
        out_shape=(
            jax.ShapeDtypeStruct((m, e), jnp.bfloat16),   # next-layer input
            jax.ShapeDtypeStruct((m, e), jnp.float32),    # updated layer-sum
        ),
        grid_spec=pltpu.PrefetchScalarGridSpec(
            num_scalar_prefetch=0,
            grid=(m // tm, k // tk),                      # reduction axis last
            in_specs=[
                pl.BlockSpec((tm, tk), lambda i, j: (i, j)),
                pl.BlockSpec((tk, e), lambda i, j: (j, 0)),
                pl.BlockSpec((tm, e), lambda i, j: (i, 0)),
            ],
            out_specs=[
                pl.BlockSpec((tm, e), lambda i, j: (i, 0)),
                pl.BlockSpec((tm, e), lambda i, j: (i, 0)),
            ],
            scratch_shapes=[pltpu.VMEM((tm, e), jnp.float32)],
        ),
        input_output_aliases={2: 1},                      # acc in -> acc out
        compiler_params=pltpu.CompilerParams(
            dimension_semantics=("parallel", "arbitrary"),
            vmem_limit_bytes=vmem_limit,
        ),
        cost_estimate=cost,
    )(adj, x, acc)


def _round_up(n, m):
    return (n + m - 1) // m * m


def _pick_tile(dim, target=512):
    # Tiles are multiples of 128 (lane-dense / MXU-aligned; >=256 desirable on
    # v6e/v7x), capped at `target` so the bf16 adjacency tiles double-buffer
    # comfortably inside v7x's 64 MiB VMEM.
    return min(target, _round_up(dim, 128))


@functools.partial(jax.jit, static_argnames=("n_layers",))
def lightgcn_forward(norm_adj, user_emb, item_emb, n_layers):
    """Returns (user_embeddings, item_embeddings) after LightGCN propagation.

    norm_adj is the (U+I, U+I) symmetrically-normalized adjacency.  LightGCN's
    user-user / item-item blocks are structurally zero, so only the two
    bipartite off-diagonal blocks are streamed through the kernel.
    """
    num_users, emb_size = user_emb.shape
    num_items = item_emb.shape[0]

    tu = _pick_tile(num_users)
    ti = _pick_tile(num_items)
    u_pad = _round_up(num_users, tu)
    i_pad = _round_up(num_items, ti)
    e_pad = _round_up(emb_size, 128)   # lane-dense output stores

    # Bipartite adjacency blocks, zero-padded and streamed in bf16.
    a_ui = norm_adj[:num_users, num_users:]          # (U, I): items -> users
    a_iu = norm_adj[num_users:, :num_users]          # (I, U): users -> items
    a_ui = jnp.pad(
        a_ui, ((0, u_pad - num_users), (0, i_pad - num_items))
    ).astype(jnp.bfloat16)
    a_iu = jnp.pad(
        a_iu, ((0, i_pad - num_items), (0, u_pad - num_users))
    ).astype(jnp.bfloat16)

    # No concatenate: user/item parts stay separate through propagation.
    u0 = jnp.pad(
        user_emb.astype(jnp.float32),
        ((0, u_pad - num_users), (0, e_pad - emb_size)),
    )
    i0 = jnp.pad(
        item_emb.astype(jnp.float32),
        ((0, i_pad - num_items), (0, e_pad - emb_size)),
    )

    # bf16 copies feed the matmuls; f32 running sums hold the layer average.
    u_bf, i_bf = u0.astype(jnp.bfloat16), i0.astype(jnp.bfloat16)
    u_acc, i_acc = u0, i0

    for _ in range(n_layers):                        # static unroll
        u_bf_next, u_acc = _propagate(a_ui, i_bf, u_acc, tu, ti)
        i_bf_next, i_acc = _propagate(a_iu, u_bf, i_acc, ti, tu)
        u_bf, i_bf = u_bf_next, i_bf_next

    inv = 1.0 / (n_layers + 1)
    user_out = (u_acc * inv)[:num_users, :emb_size]
    item_out = (i_acc * inv)[:num_items, :emb_size]
    return user_out, item_out


def _build_norm_adj(key, num_users, num_items):
    """Deterministically build a symmetrically-normalized bipartite adjacency."""
    n = num_users + num_items
    # Random binary interaction matrix R (users x items), ~10% density.
    r = (jax.random.uniform(key, (num_users, num_items)) < 0.1).astype(jnp.float32)
    a = jnp.zeros((n, n), jnp.float32)
    a = a.at[:num_users, num_users:].set(r)
    a = a.at[num_users:, :num_users].set(r.T)
    deg = jnp.maximum(a.sum(axis=1), 1.0)
    d_inv_sqrt = 1.0 / jnp.sqrt(deg)
    return a * d_inv_sqrt[:, None] * d_inv_sqrt[None, :]


if __name__ == "__main__":
    num_users, num_items, emb_size, n_layers = 48, 80, 32, 3

    key = jax.random.PRNGKey(0)
    k_adj, k_user, k_item = jax.random.split(key, 3)

    norm_adj = _build_norm_adj(k_adj, num_users, num_items)
    # nn.Embedding default init ~ N(0, 1); deterministic synthetic weights.
    user_emb = jax.random.normal(k_user, (num_users, emb_size), jnp.float32)
    item_emb = jax.random.normal(k_item, (num_items, emb_size), jnp.float32)

    u_out, i_out = lightgcn_forward(norm_adj, user_emb, item_emb, n_layers)
    u_out, i_out = jax.block_until_ready((u_out, i_out))

    # Pure-JAX f32 reference (torch semantics: dense A @ ego per layer, mean).
    ego = jnp.concatenate([user_emb, item_emb], axis=0)
    acc = ego
    cur = ego
    for _ in range(n_layers):
        cur = norm_adj @ cur
        acc = acc + cur
    ref = acc / (n_layers + 1)

    assert u_out.shape == (num_users, emb_size)
    assert i_out.shape == (num_items, emb_size)
    # Operands are streamed in bf16 (f32 MXU accumulation) -> looser tolerance
    # than the pure-f32 path.
    assert jnp.allclose(u_out, ref[:num_users], atol=5e-2, rtol=5e-2)
    assert jnp.allclose(i_out, ref[num_users:], atol=5e-2, rtol=5e-2)

    print("KERNEL_OK")
</pallas_src>

<mosaic_0001>
module attributes {stable_mosaic.version = 11 : i64} {
  func.func @_propagate_kernel(%arg0: i32, %arg1: i32, %arg2: memref<128x128xbf16, #tpu.memory_space<vmem>>, %arg3: memref<128x128xbf16, #tpu.memory_space<vmem>>, %arg4: memref<128x128xf32, #tpu.memory_space<vmem>>, %arg5: memref<128x128xbf16, #tpu.memory_space<vmem>>, %arg6: memref<128x128xf32, #tpu.memory_space<vmem>>, %arg7: memref<128x128xf32, #tpu.memory_space<vmem>>) attributes {dimension_semantics = [#tpu.dimension_semantics<parallel>, #tpu.dimension_semantics<arbitrary>], iteration_bounds = array<i64: 1, 1>, scalar_prefetch = 0 : i64, scratch_operands = 1 : i64, tpu.core_type = #tpu.core_type<tc>, window_params = [{transform_indices = @transform_0, window_bounds = array<i64: 128, 128>}, {transform_indices = @transform_1, window_bounds = array<i64: 128, 128>}, {transform_indices = @transform_2, window_bounds = array<i64: 128, 128>}, {transform_indices = @transform_3, window_bounds = array<i64: 128, 128>}, {transform_indices = @transform_4, window_bounds = array<i64: 128, 128>}]} {
    %c0_i32 = arith.constant 0 : i32
    %0 = arith.cmpi eq, %arg1, %c0_i32 : i32
    %1 = arith.extui %0 : i1 to i32
    %c0_i32_0 = arith.constant 0 : i32
    %2 = arith.cmpi ne, %1, %c0_i32_0 : i32
    scf.if %2 {
      %cst_10 = arith.constant 0.000000e+00 : f32
      %12 = vector.broadcast %cst_10 : f32 to vector<128x128xf32>
      %c0_11 = arith.constant 0 : index
      %c0_12 = arith.constant 0 : index
      %13 = vector.load %arg7[%c0_11, %c0_12] : memref<128x128xf32, #tpu.memory_space<vmem>>, vector<128x128xf32>
      tpu.vector_store %arg7[%c0_11, %c0_12], %12 {strides = array<i32>} : memref<128x128xf32, #tpu.memory_space<vmem>>, vector<128x128xf32>,
    } else {
    }
    %c0 = arith.constant 0 : index
    %c0_1 = arith.constant 0 : index
    %3 = vector.load %arg7[%c0, %c0_1] : memref<128x128xf32, #tpu.memory_space<vmem>>, vector<128x128xf32>
    %c0_2 = arith.constant 0 : index
    %c0_3 = arith.constant 0 : index
    %4 = vector.load %arg2[%c0_2, %c0_3] : memref<128x128xbf16, #tpu.memory_space<vmem>>, vector<128x128xbf16>
    %c0_4 = arith.constant 0 : index
    %c0_5 = arith.constant 0 : index
    %5 = vector.load %arg3[%c0_4, %c0_5] : memref<128x128xbf16, #tpu.memory_space<vmem>>, vector<128x128xbf16>
    %cst = arith.constant dense<0.000000e+00> : vector<128x128xf32>
    %6 = tpu.matmul %4, %5, %cst {dimension_numbers = #tpu.dot_dimension_numbers<[1], [0], [0], [1], [0, 0, 1, 1], [], []>} : vector<128x128xbf16>, vector<128x128xbf16>, vector<128x128xf32> -> vector<128x128xf32>
    %7 = arith.addf %3, %6 : vector<128x128xf32>
    %c0_6 = arith.constant 0 : index
    %c0_7 = arith.constant 0 : index
    %8 = vector.load %arg7[%c0_6, %c0_7] : memref<128x128xf32, #tpu.memory_space<vmem>>, vector<128x128xf32>
    tpu.vector_store %arg7[%c0_6, %c0_7], %7 {strides = array<i32>} : memref<128x128xf32, #tpu.memory_space<vmem>>, vector<128x128xf32>,
    %c0_i32_8 = arith.constant 0 : i32
    %9 = arith.cmpi eq, %arg1, %c0_i32_8 : i32
    %10 = arith.extui %9 : i1 to i32
    %c0_i32_9 = arith.constant 0 : i32
    %11 = arith.cmpi ne, %10, %c0_i32_9 : i32
    scf.if %11 {
      %c0_10 = arith.constant 0 : index
      %c0_11 = arith.constant 0 : index
      %12 = vector.load %arg7[%c0_10, %c0_11] : memref<128x128xf32, #tpu.memory_space<vmem>>, vector<128x128xf32>
      %13 = arith.truncf %12 : vector<128x128xf32> to vector<128x128xbf16>
      %c0_12 = arith.constant 0 : index
      %c0_13 = arith.constant 0 : index
      %14 = vector.load %arg5[%c0_12, %c0_13] : memref<128x128xbf16, #tpu.memory_space<vmem>>, vector<128x128xbf16>
      tpu.vector_store %arg5[%c0_12, %c0_13], %13 {strides = array<i32>} : memref<128x128xbf16, #tpu.memory_space<vmem>>, vector<128x128xbf16>,
      %c0_14 = arith.constant 0 : index
      %c0_15 = arith.constant 0 : index
      %15 = vector.load %arg4[%c0_14, %c0_15] : memref<128x128xf32, #tpu.memory_space<vmem>>, vector<128x128xf32>
      %c0_16 = arith.constant 0 : index
      %c0_17 = arith.constant 0 : index
      %16 = vector.load %arg7[%c0_16, %c0_17] : memref<128x128xf32, #tpu.memory_space<vmem>>, vector<128x128xf32>
      %17 = arith.addf %15, %16 : vector<128x128xf32>
      %c0_18 = arith.constant 0 : index
      %c0_19 = arith.constant 0 : index
      %18 = vector.load %arg6[%c0_18, %c0_19] : memref<128x128xf32, #tpu.memory_space<vmem>>, vector<128x128xf32>
      tpu.vector_store %arg6[%c0_18, %c0_19], %17 {strides = array<i32>} : memref<128x128xf32, #tpu.memory_space<vmem>>, vector<128x128xf32>,
    } else {
    }
    return
  }
  func.func @transform_0(%arg0: i32, %arg1: i32) -> (i32, i32) {
    %c0_i32 = arith.constant 0 : i32
    return %arg0, %arg1 : i32, i32
  }
  func.func @transform_1(%arg0: i32, %arg1: i32) -> (i32, i32) {
    %c0_i32 = arith.constant 0 : i32
    %c0_i32_0 = arith.constant 0 : i32
    return %arg1, %c0_i32 : i32, i32
  }
  func.func @transform_2(%arg0: i32, %arg1: i32) -> (i32, i32) {
    %c0_i32 = arith.constant 0 : i32
    %c0_i32_0 = arith.constant 0 : i32
    return %arg0, %c0_i32 : i32, i32
  }
  func.func @transform_3(%arg0: i32, %arg1: i32) -> (i32, i32) {
    %c0_i32 = arith.constant 0 : i32
    %c0_i32_0 = arith.constant 0 : i32
    return %arg0, %c0_i32 : i32, i32
  }
  func.func @transform_4(%arg0: i32, %arg1: i32) -> (i32, i32) {
    %c0_i32 = arith.constant 0 : i32
    %c0_i32_0 = arith.constant 0 : i32
    return %arg0, %c0_i32 : i32, i32
  }
}

module attributes {stable_mosaic.version = 11 : i64} {
  func.func @_propagate_kernel(%arg0: i32, %arg1: i32, %arg2: memref<128x128xbf16, #tpu.memory_space<vmem>>, %arg3: memref<128x128xbf16, #tpu.memory_space<vmem>>, %arg4: memref<128x128xf32, #tpu.memory_space<vmem>>, %arg5: memref<128x128xbf16, #tpu.memory_space<vmem>>, %arg6: memref<128x128xf32, #tpu.memory_space<vmem>>, %arg7: memref<128x128xf32, #tpu.memory_space<vmem>>) attributes {dimension_semantics = [#tpu.dimension_semantics<parallel>, #tpu.dimension_semantics<arbitrary>], iteration_bounds = array<i64: 1, 1>, scalar_prefetch = 0 : i64, scratch_operands = 1 : i64, tpu.core_type = #tpu.core_type<tc>, window_params = [{transform_indices = @transform_0, window_bounds = array<i64: 128, 128>}, {transform_indices = @transform_1, window_bounds = array<i64: 128, 128>}, {transform_indices = @transform_2, window_bounds = array<i64: 128, 128>}, {transform_indices = @transform_3, window_bounds = array<i64: 128, 128>}, {transform_indices = @transform_4, window_bounds = array<i64: 128, 128>}]} {
    %c0_i32 = arith.constant 0 : i32
    %0 = arith.cmpi eq, %arg1, %c0_i32 : i32
    %1 = arith.extui %0 : i1 to i32
    %c0_i32_0 = arith.constant 0 : i32
    %2 = arith.cmpi ne, %1, %c0_i32_0 : i32
    scf.if %2 {
      %cst_10 = arith.constant 0.000000e+00 : f32
      %12 = vector.broadcast %cst_10 : f32 to vector<128x128xf32>
      %c0_11 = arith.constant 0 : index
      %c0_12 = arith.constant 0 : index
      %13 = vector.load %arg7[%c0_11, %c0_12] : memref<128x128xf32, #tpu.memory_space<vmem>>, vector<128x128xf32>
      tpu.vector_store %arg7[%c0_11, %c0_12], %12 {strides = array<i32>} : memref<128x128xf32, #tpu.memory_space<vmem>>, vector<128x128xf32>,
    } else {
    }
    %c0 = arith.constant 0 : index
    %c0_1 = arith.constant 0 : index
    %3 = vector.load %arg7[%c0, %c0_1] : memref<128x128xf32, #tpu.memory_space<vmem>>, vector<128x128xf32>
    %c0_2 = arith.constant 0 : index
    %c0_3 = arith.constant 0 : index
    %4 = vector.load %arg2[%c0_2, %c0_3] : memref<128x128xbf16, #tpu.memory_space<vmem>>, vector<128x128xbf16>
    %c0_4 = arith.constant 0 : index
    %c0_5 = arith.constant 0 : index
    %5 = vector.load %arg3[%c0_4, %c0_5] : memref<128x128xbf16, #tpu.memory_space<vmem>>, vector<128x128xbf16>
    %cst = arith.constant dense<0.000000e+00> : vector<128x128xf32>
    %6 = tpu.matmul %4, %5, %cst {dimension_numbers = #tpu.dot_dimension_numbers<[1], [0], [0], [1], [0, 0, 1, 1], [], []>} : vector<128x128xbf16>, vector<128x128xbf16>, vector<128x128xf32> -> vector<128x128xf32>
    %7 = arith.addf %3, %6 : vector<128x128xf32>
    %c0_6 = arith.constant 0 : index
    %c0_7 = arith.constant 0 : index
    %8 = vector.load %arg7[%c0_6, %c0_7] : memref<128x128xf32, #tpu.memory_space<vmem>>, vector<128x128xf32>
    tpu.vector_store %arg7[%c0_6, %c0_7], %7 {strides = array<i32>} : memref<128x128xf32, #tpu.memory_space<vmem>>, vector<128x128xf32>,
    %c0_i32_8 = arith.constant 0 : i32
    %9 = arith.cmpi eq, %arg1, %c0_i32_8 : i32
    %10 = arith.extui %9 : i1 to i32
    %c0_i32_9 = arith.constant 0 : i32
    %11 = arith.cmpi ne, %10, %c0_i32_9 : i32
    scf.if %11 {
      %c0_10 = arith.constant 0 : index
      %c0_11 = arith.constant 0 : index
      %12 = vector.load %arg7[%c0_10, %c0_11] : memref<128x128xf32, #tpu.memory_space<vmem>>, vector<128x128xf32>
      %13 = arith.truncf %12 : vector<128x128xf32> to vector<128x128xbf16>
      %c0_12 = arith.constant 0 : index
      %c0_13 = arith.constant 0 : index
      %14 = vector.load %arg5[%c0_12, %c0_13] : memref<128x128xbf16, #tpu.memory_space<vmem>>, vector<128x128xbf16>
      tpu.vector_store %arg5[%c0_12, %c0_13], %13 {strides = array<i32>} : memref<128x128xbf16, #tpu.memory_space<vmem>>, vector<128x128xbf16>,
      %c0_14 = arith.constant 0 : index
      %c0_15 = arith.constant 0 : index
      %15 = vector.load %arg4[%c0_14, %c0_15] : memref<128x128xf32, #tpu.memory_space<vmem>>, vector<128x128xf32>
      %c0_16 = arith.constant 0 : index
      %c0_17 = arith.constant 0 : index
      %16 = vector.load %arg7[%c0_16, %c0_17] : memref<128x128xf32, #tpu.memory_space<vmem>>, vector<128x128xf32>
      %17 = arith.addf %15, %16 : vector<128x128xf32>
      %c0_18 = arith.constant 0 : index
      %c0_19 = arith.constant 0 : index
      %18 = vector.load %arg6[%c0_18, %c0_19] : memref<128x128xf32, #tpu.memory_space<vmem>>, vector<128x128xf32>
      tpu.vector_store %arg6[%c0_18, %c0_19], %17 {strides = array<i32>} : memref<128x128xf32, #tpu.memory_space<vmem>>, vector<128x128xf32>,
    } else {
    }
    return
  }
  func.func @transform_0(%arg0: i32, %arg1: i32) -> (i32, i32) {
    %c0_i32 = arith.constant 0 : i32
    return %arg0, %arg1 : i32, i32
  }
  func.func @transform_1(%arg0: i32, %arg1: i32) -> (i32, i32) {
    %c0_i32 = arith.constant 0 : i32
    %c0_i32_0 = arith.constant 0 : i32
    return %arg1, %c0_i32 : i32, i32
  }
  func.func @transform_2(%arg0: i32, %arg1: i32) -> (i32, i32) {
    %c0_i32 = arith.constant 0 : i32
    %c0_i32_0 = arith.constant 0 : i32
    return %arg0, %c0_i32 : i32, i32
  }
  func.func @transform_3(%arg0: i32, %arg1: i32) -> (i32, i32) {
    %c0_i32 = arith.constant 0 : i32
    %c0_i32_0 = arith.constant 0 : i32
    return %arg0, %c0_i32 : i32, i32
  }
  func.func @transform_4(%arg0: i32, %arg1: i32) -> (i32, i32) {
    %c0_i32 = arith.constant 0 : i32
    %c0_i32_0 = arith.constant 0 : i32
    return %arg0, %c0_i32 : i32, i32
  }
}

</mosaic_0001>

<llo_original>
// kernel: lightgcn_forward.7
$region0: #{lightgcn_forward.7}
  #allocation0 [shape = 'u32[]', space=smem, size = 0x4, offset = 0x4, fixed_abs, tag = 'smem constant byte address 0x4 - core index']
  #allocation1 [shape = 'u32[144,128]{1,0:T(1,128)}', space=vmem, size = 0x12000, scoped, tag = 'internal scratch']
  #allocation2 [shape = 'f32[128,128]{1,0:T(8,128)}', space=vmem, size = 0x10000, scoped, tag = 'scratch operand']
  %s0 = inlined_call_operand.vmem [shape: bf16[128,128], index: 0, kind: input, shape index: {}]
  %s1 = inlined_call_operand.vmem [shape: bf16[128,128], index: 1, kind: input, shape index: {}]
  %s2 = inlined_call_operand.vmem [shape: f32[128,128], index: 2, kind: input, shape index: {}, may-alias: {2,4}]
  %s3 = inlined_call_operand.vmem [shape: bf16[128,128], index: 3, kind: output, shape index: {0}]
  %s4 = inlined_call_operand.vmem [shape: f32[128,128], index: 4, kind: output, shape index: {1}, may-alias: {2,4}]
  %5 = xla_tuple %s3, %s4
  %s6 = sld [smem:[#allocation0]]
  $region38: #{lightgcn_forward.7} parent=0
    _
  %s8 = ssub.s32 1, %s6
  %s9 = scalar_select 0, %s8, %s6
  // Predicated region
  $region2: #{lightgcn_forward.7} parent=0 // pred_check
    _
  $region3: #{lightgcn_forward.7} parent=0 // pred_check_branch
    %11 = sbr.rel (0) target = $region5
  $region4: #{lightgcn_forward.7} parent=0 // pred_region
    _
  $region5: #{lightgcn_forward.7} parent=0 // pred_fallthru
    _
  // Predicated region
  $region6: #{lightgcn_forward.7} parent=0 // pred_check
    _
  $region7: #{lightgcn_forward.7} parent=0 // pred_check_branch
    %13 = sbr.rel (0) target = $region9
  $region8: #{lightgcn_forward.7} parent=0 // pred_region
    _
  $region9: #{lightgcn_forward.7} parent=0 // pred_fallthru
    _
  // Predicated region
  $region10: #{lightgcn_forward.7} parent=0 // pred_check
    _
  $region11: #{lightgcn_forward.7} parent=0 // pred_check_branch
    %15 = sbr.rel (0) target = $region13
  $region12: #{lightgcn_forward.7} parent=0 // pred_region
    _
  $region13: #{lightgcn_forward.7} parent=0 // pred_fallthru
    _
  %p17 = scmp.eq.s32.totalorder 0, 0
  // Predicated region
  $region14: #{lightgcn_forward.7} parent=0 // pred_check
    %p18 = pneg %p17
  $region15: #{lightgcn_forward.7} parent=0 // pred_check_branch
    %20 = sbr.rel (%p18) target = $region17
  $region16: #{lightgcn_forward.7} parent=0 // pred_region
    %21 = vst [vmem:[#allocation2] sm:$0xff] 0.0
    %22 = vst [vmem:[#allocation2 + $0x8] sm:$0xff] 0.0
    %23 = vst [vmem:[#allocation2 + $0x10] sm:$0xff] 0.0
    %24 = vst [vmem:[#allocation2 + $0x18] sm:$0xff] 0.0
    %25 = vst [vmem:[#allocation2 + $0x20] sm:$0xff] 0.0
    %26 = vst [vmem:[#allocation2 + $0x28] sm:$0xff] 0.0
    %27 = vst [vmem:[#allocation2 + $0x30] sm:$0xff] 0.0
    %28 = vst [vmem:[#allocation2 + $0x38] sm:$0xff] 0.0
    %29 = vst [vmem:[#allocation2 + $0x40] sm:$0xff] 0.0
    %30 = vst [vmem:[#allocation2 + $0x48] sm:$0xff] 0.0
    %31 = vst [vmem:[#allocation2 + $0x50] sm:$0xff] 0.0
    %32 = vst [vmem:[#allocation2 + $0x58] sm:$0xff] 0.0
    %33 = vst [vmem:[#allocation2 + $0x60] sm:$0xff] 0.0
    %34 = vst [vmem:[#allocation2 + $0x68] sm:$0xff] 0.0
    %35 = vst [vmem:[#allocation2 + $0x70] sm:$0xff] 0.0
    %36 = vst [vmem:[#allocation2 + $0x78] sm:$0xff] 0.0
  $region17: #{lightgcn_forward.7} parent=0 // pred_fallthru
    _
  %v37 = vld [vmem:[#allocation2] sm:$0xff]
  %v38 = vld [vmem:[#allocation2 + $0x8] sm:$0xff]
  %v39 = vld [vmem:[#allocation2 + $0x10] sm:$0xff]
  %v40 = vld [vmem:[#allocation2 + $0x18] sm:$0xff]
  %v41 = vld [vmem:[#allocation2 + $0x20] sm:$0xff]
  %v42 = vld [vmem:[#allocation2 + $0x28] sm:$0xff]
  %v43 = vld [vmem:[#allocation2 + $0x30] sm:$0xff]
  %v44 = vld [vmem:[#allocation2 + $0x38] sm:$0xff]
  %v45 = vld [vmem:[#allocation2 + $0x40] sm:$0xff]
  %v46 = vld [vmem:[#allocation2 + $0x48] sm:$0xff]
  %v47 = vld [vmem:[#allocation2 + $0x50] sm:$0xff]
  %v48 = vld [vmem:[#allocation2 + $0x58] sm:$0xff]
  %v49 = vld [vmem:[#allocation2 + $0x60] sm:$0xff]
  %v50 = vld [vmem:[#allocation2 + $0x68] sm:$0xff]
  %v51 = vld [vmem:[#allocation2 + $0x70] sm:$0xff]
  %v52 = vld [vmem:[#allocation2 + $0x78] sm:$0xff]
  %v53 = vld [vmem:[%s0] sm:$0xf]
  %v54 = vld [vmem:[%s0 + $0x4] sm:$0xf]
  %v55 = vld [vmem:[%s0 + $0x8] sm:$0xf]
  %v56 = vld [vmem:[%s0 + $0xc] sm:$0xf]
  %v57 = vld [vmem:[%s0 + $0x10] sm:$0xf]
  %v58 = vld [vmem:[%s0 + $0x14] sm:$0xf]
  %v59 = vld [vmem:[%s0 + $0x18] sm:$0xf]
  %v60 = vld [vmem:[%s0 + $0x1c] sm:$0xf]
  %v61 = vld [vmem:[%s0 + $0x20] sm:$0xf]
  %v62 = vld [vmem:[%s0 + $0x24] sm:$0xf]
  %v63 = vld [vmem:[%s0 + $0x28] sm:$0xf]
  %v64 = vld [vmem:[%s0 + $0x2c] sm:$0xf]
  %v65 = vld [vmem:[%s0 + $0x30] sm:$0xf]
  %v66 = vld [vmem:[%s0 + $0x34] sm:$0xf]
  %v67 = vld [vmem:[%s0 + $0x38] sm:$0xf]
  %v68 = vld [vmem:[%s0 + $0x3c] sm:$0xf]
  %v69 = vld [vmem:[%s1] sm:$0xf]
  %v70 = vld [vmem:[%s1 + $0x4] sm:$0xf]
  %v71 = vld [vmem:[%s1 + $0x8] sm:$0xf]
  %v72 = vld [vmem:[%s1 + $0xc] sm:$0xf]
  %v73 = vld [vmem:[%s1 + $0x10] sm:$0xf]
  %v74 = vld [vmem:[%s1 + $0x14] sm:$0xf]
  %v75 = vld [vmem:[%s1 + $0x18] sm:$0xf]
  %v76 = vld [vmem:[%s1 + $0x1c] sm:$0xf]
  %v77 = vld [vmem:[%s1 + $0x20] sm:$0xf]
  %v78 = vld [vmem:[%s1 + $0x24] sm:$0xf]
  %v79 = vld [vmem:[%s1 + $0x28] sm:$0xf]
  %v80 = vld [vmem:[%s1 + $0x2c] sm:$0xf]
  %v81 = vld [vmem:[%s1 + $0x30] sm:$0xf]
  %v82 = vld [vmem:[%s1 + $0x34] sm:$0xf]
  %v83 = vld [vmem:[%s1 + $0x38] sm:$0xf]
  %v84 = vld [vmem:[%s1 + $0x3c] sm:$0xf]
  %v101 = vunpack.c.l.b16 %v53
  %v102 = vunpack.c.l.b16 %v54
  %v103 = vunpack.c.l.b16 %v55
  %v104 = vunpack.c.l.b16 %v56
  %v105 = vunpack.c.l.b16 %v57
  %v106 = vunpack.c.l.b16 %v58
  %v107 = vunpack.c.l.b16 %v59
  %v108 = vunpack.c.l.b16 %v60
  %v109 = vunpack.c.l.b16 %v61
  %v110 = vunpack.c.l.b16 %v62
  %v111 = vunpack.c.l.b16 %v63
  %v112 = vunpack.c.l.b16 %v64
  %v113 = vunpack.c.l.b16 %v65
  %v114 = vunpack.c.l.b16 %v66
  %v115 = vunpack.c.l.b16 %v67
  %v116 = vunpack.c.l.b16 %v68
  %v117 = vpack.c.b16 %v102, %v101
  %v118 = vpack.c.b16 %v104, %v103
  %v119 = vpack.c.b16 %v106, %v105
  %v120 = vpack.c.b16 %v108, %v107
  %v121 = vpack.c.b16 %v110, %v109
  %v122 = vpack.c.b16 %v112, %v111
  %v123 = vpack.c.b16 %v114, %v113
  %v124 = vpack.c.b16 %v116, %v115
  %v149 = vunpack.c.l.b16 %v69
  %v150 = vunpack.c.l.b16 %v70
  %v151 = vunpack.c.l.b16 %v71
  %v152 = vunpack.c.l.b16 %v72
  %v153 = vunpack.c.l.b16 %v73
  %v154 = vunpack.c.l.b16 %v74
  %v155 = vunpack.c.l.b16 %v75
  %v156 = vunpack.c.l.b16 %v76
  %v157 = vunpack.c.l.b16 %v77
  %v158 = vunpack.c.l.b16 %v78
  %v159 = vunpack.c.l.b16 %v79
  %v160 = vunpack.c.l.b16 %v80
  %v161 = vunpack.c.l.b16 %v81
  %v162 = vunpack.c.l.b16 %v82
  %v163 = vunpack.c.l.b16 %v83
  %v164 = vunpack.c.l.b16 %v84
  %v165 = vpack.c.b16 %v150, %v149
  %v166 = vpack.c.b16 %v152, %v151
  %v167 = vpack.c.b16 %v154, %v153
  %v168 = vpack.c.b16 %v156, %v155
  %v169 = vpack.c.b16 %v158, %v157
  %v170 = vpack.c.b16 %v160, %v159
  %v171 = vpack.c.b16 %v162, %v161
  %v172 = vpack.c.b16 %v164, %v163
  %181 = vmatprep.subr.bf16.mxu0 0
  %182 = vmatpush1.bf16.msra.mxu0 %v172
  %183 = vmatprep.subr.bf16.mxu0 0
  %184 = vmatpush1.bf16.msra.mxu0 %v171
  %185 = vmatprep.subr.bf16.mxu0 0
  %186 = vmatpush1.bf16.msra.mxu0 %v170
  %187 = vmatprep.subr.bf16.mxu0 0
  %188 = vmatpush1.bf16.msra.mxu0 %v169
  %189 = vmatprep.subr.bf16.mxu0 0
  %190 = vmatpush1.bf16.msra.mxu0 %v168
  %191 = vmatprep.subr.bf16.mxu0 0
  %192 = vmatpush1.bf16.msra.mxu0 %v167
  %193 = vmatprep.subr.bf16.mxu0 0
  %194 = vmatpush1.bf16.msra.mxu0 %v166
  %195 = vmatprep.subr.bf16.mxu0 0
  %196 = vmatpush1.bf16.msra.mxu0 %v165
  %197 = vmatprep.subr.bf16.mxu0 0
  %198 = vmatpush2.bf16.msra.mxu0 0
  %199 = vmatprep.subr.bf16.mxu0 0
  %200 = vmatpush2.bf16.msra.mxu0 0
  %201 = vmatprep.subr.bf16.mxu0 0
  %202 = vmatpush2.bf16.msra.mxu0 0
  %203 = vmatprep.subr.bf16.mxu0 0
  %204 = vmatpush2.bf16.msra.mxu0 0
  %205 = vmatprep.subr.bf16.mxu0 0
  %206 = vmatpush2.bf16.msra.mxu0 0
  %207 = vmatprep.subr.bf16.mxu0 0
  %208 = vmatpush2.bf16.msra.mxu0 0
  %209 = vmatprep.subr.bf16.mxu0 0
  %210 = vmatpush2.bf16.msra.mxu0 0
  %211 = vmatprep.subr.bf16.mxu0 0
  %212 = vmatpush2.bf16.msra.mxu0 0
  %213 = vmatprep.mubr.bf16.mxu0 0
  %214 = vmatmul.mubr.bf16.gmra.mxu0 %v117
  %v215 = vpop.f32.mrf.mxu0
  %v216 = vadd.f32 0.0, %v215
  %v217 = vpop.f32.mrf.mxu0
  %v218 = vpop.f32.mrf.mxu0
  %v219 = vadd.f32 0.0, %v218
  %v220 = vpop.f32.mrf.mxu0
  %221 = vmatprep.mubr.bf16.mxu0 0
  %222 = vmatmul.mubr.bf16.gmra.mxu0 %v118
  %v223 = vpop.f32.mrf.mxu0
  %v224 = vadd.f32 0.0, %v223
  %v225 = vpop.f32.mrf.mxu0
  %v226 = vpop.f32.mrf.mxu0
  %v227 = vadd.f32 0.0, %v226
  %v228 = vpop.f32.mrf.mxu0
  %229 = vmatprep.mubr.bf16.mxu0 0
  %230 = vmatmul.mubr.bf16.gmra.mxu0 %v119
  %v231 = vpop.f32.mrf.mxu0
  %v232 = vadd.f32 0.0, %v231
  %v233 = vpop.f32.mrf.mxu0
  %v234 = vpop.f32.mrf.mxu0
  %v235 = vadd.f32 0.0, %v234
  %v236 = vpop.f32.mrf.mxu0
  %237 = vmatprep.mubr.bf16.mxu0 0
  %238 = vmatmul.mubr.bf16.gmra.mxu0 %v120
  %v239 = vpop.f32.mrf.mxu0
  %v240 = vadd.f32 0.0, %v239
  %v241 = vpop.f32.mrf.mxu0
  %v242 = vpop.f32.mrf.mxu0
  %v243 = vadd.f32 0.0, %v242
  %v244 = vpop.f32.mrf.mxu0
  %245 = vmatprep.mubr.bf16.mxu0 0
  %246 = vmatmul.mubr.bf16.gmra.mxu0 %v121
  %v247 = vpop.f32.mrf.mxu0
  %v248 = vadd.f32 0.0, %v247
  %v249 = vpop.f32.mrf.mxu0
  %v250 = vpop.f32.mrf.mxu0
  %v251 = vadd.f32 0.0, %v250
  %v252 = vpop.f32.mrf.mxu0
  %253 = vmatprep.mubr.bf16.mxu0 0
  %254 = vmatmul.mubr.bf16.gmra.mxu0 %v122
  %v255 = vpop.f32.mrf.mxu0
  %v256 = vadd.f32 0.0, %v255
  %v257 = vpop.f32.mrf.mxu0
  %v258 = vpop.f32.mrf.mxu0
  %v259 = vadd.f32 0.0, %v258
  %v260 = vpop.f32.mrf.mxu0
  %261 = vmatprep.mubr.bf16.mxu0 0
  %262 = vmatmul.mubr.bf16.gmra.mxu0 %v123
  %v263 = vpop.f32.mrf.mxu0
  %v264 = vadd.f32 0.0, %v263
  %v265 = vpop.f32.mrf.mxu0
  %v266 = vpop.f32.mrf.mxu0
  %v267 = vadd.f32 0.0, %v266
  %v268 = vpop.f32.mrf.mxu0
  %269 = vmatprep.mubr.bf16.mxu0 0
  %270 = vmatmul.mubr.bf16.gmra.mxu0 %v124
  %v271 = vpop.f32.mrf.mxu0
  %v272 = vadd.f32 0.0, %v271
  %v273 = vpop.f32.mrf.mxu0
  %v274 = vpop.f32.mrf.mxu0
  %v275 = vadd.f32 0.0, %v274
  %v276 = vpop.f32.mrf.mxu0
  %277 = vdwg.mxu0
  %v278 = vadd.f32 %v37, %v216
  %v279 = vadd.f32 %v38, %v219
  %v280 = vadd.f32 %v39, %v224
  %v281 = vadd.f32 %v40, %v227
  %v282 = vadd.f32 %v41, %v232
  %v283 = vadd.f32 %v42, %v235
  %v284 = vadd.f32 %v43, %v240
  %v285 = vadd.f32 %v44, %v243
  %v286 = vadd.f32 %v45, %v248
  %v287 = vadd.f32 %v46, %v251
  %v288 = vadd.f32 %v47, %v256
  %v289 = vadd.f32 %v48, %v259
  %v290 = vadd.f32 %v49, %v264
  %v291 = vadd.f32 %v50, %v267
  %v292 = vadd.f32 %v51, %v272
  %v293 = vadd.f32 %v52, %v275
  %294 = vst [vmem:[#allocation2] sm:$0xff] %v278
  %295 = vst [vmem:[#allocation2 + $0x8] sm:$0xff] %v279
  %296 = vst [vmem:[#allocation2 + $0x10] sm:$0xff] %v280
  %297 = vst [vmem:[#allocation2 + $0x18] sm:$0xff] %v281
  %298 = vst [vmem:[#allocation2 + $0x20] sm:$0xff] %v282
  %299 = vst [vmem:[#allocation2 + $0x28] sm:$0xff] %v283
  %300 = vst [vmem:[#allocation2 + $0x30] sm:$0xff] %v284
  %301 = vst [vmem:[#allocation2 + $0x38] sm:$0xff] %v285
  %302 = vst [vmem:[#allocation2 + $0x40] sm:$0xff] %v286
  %303 = vst [vmem:[#allocation2 + $0x48] sm:$0xff] %v287
  %304 = vst [vmem:[#allocation2 + $0x50] sm:$0xff] %v288
  %305 = vst [vmem:[#allocation2 + $0x58] sm:$0xff] %v289
  %306 = vst [vmem:[#allocation2 + $0x60] sm:$0xff] %v290
  %307 = vst [vmem:[#allocation2 + $0x68] sm:$0xff] %v291
  %308 = vst [vmem:[#allocation2 + $0x70] sm:$0xff] %v292
  %309 = vst [vmem:[#allocation2 + $0x78] sm:$0xff] %v293
  // Predicated region
  $region18: #{lightgcn_forward.7} parent=0 // pred_check
    %p310 = pneg %p17
  $region19: #{lightgcn_forward.7} parent=0 // pred_check_branch
    %312 = sbr.rel (%p310) target = $region21
  $region20: #{lightgcn_forward.7} parent=0 // pred_region
    %v313 = vld [vmem:[#allocation2] sm:$0xff]
    %v314 = vld [vmem:[#allocation2 + $0x8] sm:$0xff]
    %v315 = vld [vmem:[#allocation2 + $0x10] sm:$0xff]
    %v316 = vld [vmem:[#allocation2 + $0x18] sm:$0xff]
    %v317 = vld [vmem:[#allocation2 + $0x20] sm:$0xff]
    %v318 = vld [vmem:[#allocation2 + $0x28] sm:$0xff]
    %v319 = vld [vmem:[#allocation2 + $0x30] sm:$0xff]
    %v320 = vld [vmem:[#allocation2 + $0x38] sm:$0xff]
    %v321 = vld [vmem:[#allocation2 + $0x40] sm:$0xff]
    %v322 = vld [vmem:[#allocation2 + $0x48] sm:$0xff]
    %v323 = vld [vmem:[#allocation2 + $0x50] sm:$0xff]
    %v324 = vld [vmem:[#allocation2 + $0x58] sm:$0xff]
    %v325 = vld [vmem:[#allocation2 + $0x60] sm:$0xff]
    %v326 = vld [vmem:[#allocation2 + $0x68] sm:$0xff]
    %v327 = vld [vmem:[#allocation2 + $0x70] sm:$0xff]
    %v328 = vld [vmem:[#allocation2 + $0x78] sm:$0xff]
    %v329 = vpack.c.bf16 %v314, %v313
    %v330 = vpack.c.bf16 %v316, %v315
    %v331 = vpack.c.bf16 %v318, %v317
    %v332 = vpack.c.bf16 %v320, %v319
    %v333 = vpack.c.bf16 %v322, %v321
    %v334 = vpack.c.bf16 %v324, %v323
    %v335 = vpack.c.bf16 %v326, %v325
    %v336 = vpack.c.bf16 %v328, %v327
    %v345 = vunpack.c.l.b16 %v329
    %v346 = vunpack.c.h.b16 %v329
    %v347 = vunpack.c.l.b16 %v330
    %v348 = vunpack.c.h.b16 %v330
    %v349 = vunpack.c.l.b16 %v331
    %v350 = vunpack.c.h.b16 %v331
    %v351 = vunpack.c.l.b16 %v332
    %v352 = vunpack.c.h.b16 %v332
    %v353 = vunpack.c.l.b16 %v333
    %v354 = vunpack.c.h.b16 %v333
    %v355 = vunpack.c.l.b16 %v334
    %v356 = vunpack.c.h.b16 %v334
    %v357 = vunpack.c.l.b16 %v335
    %v358 = vunpack.c.h.b16 %v335
    %v359 = vunpack.c.l.b16 %v336
    %v360 = vunpack.c.h.b16 %v336
    %v361 = vpack.c.b16 %v345, %v345
    %v362 = vpack.c.b16 %v346, %v346
    %v363 = vpack.c.b16 %v347, %v347
    %v364 = vpack.c.b16 %v348, %v348
    %v365 = vpack.c.b16 %v349, %v349
    %v366 = vpack.c.b16 %v350, %v350
    %v367 = vpack.c.b16 %v351, %v351
    %v368 = vpack.c.b16 %v352, %v352
    %v369 = vpack.c.b16 %v353, %v353
    %v370 = vpack.c.b16 %v354, %v354
    %v371 = vpack.c.b16 %v355, %v355
    %v372 = vpack.c.b16 %v356, %v356
    %v373 = vpack.c.b16 %v357, %v357
    %v374 = vpack.c.b16 %v358, %v358
    %v375 = vpack.c.b16 %v359, %v359
    %v376 = vpack.c.b16 %v360, %v360
    %393 = vst [vmem:[%s3] sm:$0xf] %v361
    %394 = vst [vmem:[%s3 + $0x4] sm:$0xf] %v362
    %395 = vst [vmem:[%s3 + $0x8] sm:$0xf] %v363
    %396 = vst [vmem:[%s3 + $0xc] sm:$0xf] %v364
    %397 = vst [vmem:[%s3 + $0x10] sm:$0xf] %v365
    %398 = vst [vmem:[%s3 + $0x14] sm:$0xf] %v366
    %399 = vst [vmem:[%s3 + $0x18] sm:$0xf] %v367
    %400 = vst [vmem:[%s3 + $0x1c] sm:$0xf] %v368
    %401 = vst [vmem:[%s3 + $0x20] sm:$0xf] %v369
    %402 = vst [vmem:[%s3 + $0x24] sm:$0xf] %v370
    %403 = vst [vmem:[%s3 + $0x28] sm:$0xf] %v371
    %404 = vst [vmem:[%s3 + $0x2c] sm:$0xf] %v372
    %405 = vst [vmem:[%s3 + $0x30] sm:$0xf] %v373
    %406 = vst [vmem:[%s3 + $0x34] sm:$0xf] %v374
    %407 = vst [vmem:[%s3 + $0x38] sm:$0xf] %v375
    %408 = vst [vmem:[%s3 + $0x3c] sm:$0xf] %v376
    %v409 = vld [vmem:[%s2] sm:$0xff]
    %v410 = vld [vmem:[%s2 + $0x8] sm:$0xff]
    %v411 = vld [vmem:[%s2 + $0x10] sm:$0xff]
    %v412 = vld [vmem:[%s2 + $0x18] sm:$0xff]
    %v413 = vld [vmem:[%s2 + $0x20] sm:$0xff]
    %v414 = vld [vmem:[%s2 + $0x28] sm:$0xff]
    %v415 = vld [vmem:[%s2 + $0x30] sm:$0xff]
    %v416 = vld [vmem:[%s2 + $0x38] sm:$0xff]
    %v417 = vld [vmem:[%s2 + $0x40] sm:$0xff]
    %v418 = vld [vmem:[%s2 + $0x48] sm:$0xff]
    %v419 = vld [vmem:[%s2 + $0x50] sm:$0xff]
    %v420 = vld [vmem:[%s2 + $0x58] sm:$0xff]
    %v421 = vld [vmem:[%s2 + $0x60] sm:$0xff]
    %v422 = vld [vmem:[%s2 + $0x68] sm:$0xff]
    %v423 = vld [vmem:[%s2 + $0x70] sm:$0xff]
    %v424 = vld [vmem:[%s2 + $0x78] sm:$0xff]
    %v425 = vld [vmem:[#allocation2] sm:$0xff]
    %v426 = vld [vmem:[#allocation2 + $0x8] sm:$0xff]
    %v427 = vld [vmem:[#allocation2 + $0x10] sm:$0xff]
    %v428 = vld [vmem:[#allocation2 + $0x18] sm:$0xff]
    %v429 = vld [vmem:[#allocation2 + $0x20] sm:$0xff]
    %v430 = vld [vmem:[#allocation2 + $0x28] sm:$0xff]
    %v431 = vld [vmem:[#allocation2 + $0x30] sm:$0xff]
    %v432 = vld [vmem:[#allocation2 + $0x38] sm:$0xff]
    %v433 = vld [vmem:[#allocation2 + $0x40] sm:$0xff]
    %v434 = vld [vmem:[#allocation2 + $0x48] sm:$0xff]
    %v435 = vld [vmem:[#allocation2 + $0x50] sm:$0xff]
    %v436 = vld [vmem:[#allocation2 + $0x58] sm:$0xff]
    %v437 = vld [vmem:[#allocation2 + $0x60] sm:$0xff]
    %v438 = vld [vmem:[#allocation2 + $0x68] sm:$0xff]
    %v439 = vld [vmem:[#allocation2 + $0x70] sm:$0xff]
    %v440 = vld [vmem:[#allocation2 + $0x78] sm:$0xff]
    %v441 = vadd.f32 %v409, %v425
    %v442 = vadd.f32 %v410, %v426
    %v443 = vadd.f32 %v411, %v427
    %v444 = vadd.f32 %v412, %v428
    %v445 = vadd.f32 %v413, %v429
    %v446 = vadd.f32 %v414, %v430
    %v447 = vadd.f32 %v415, %v431
    %v448 = vadd.f32 %v416, %v432
    %v449 = vadd.f32 %v417, %v433
    %v450 = vadd.f32 %v418, %v434
    %v451 = vadd.f32 %v419, %v435
    %v452 = vadd.f32 %v420, %v436
    %v453 = vadd.f32 %v421, %v437
    %v454 = vadd.f32 %v422, %v438
    %v455 = vadd.f32 %v423, %v439
    %v456 = vadd.f32 %v424, %v440
    %457 = vst [vmem:[%s4] sm:$0xff] %v441
    %458 = vst [vmem:[%s4 + $0x8] sm:$0xff] %v442
    %459 = vst [vmem:[%s4 + $0x10] sm:$0xff] %v443
    %460 = vst [vmem:[%s4 + $0x18] sm:$0xff] %v444
    %461 = vst [vmem:[%s4 + $0x20] sm:$0xff] %v445
    %462 = vst [vmem:[%s4 + $0x28] sm:$0xff] %v446
    %463 = vst [vmem:[%s4 + $0x30] sm:$0xff] %v447
    %464 = vst [vmem:[%s4 + $0x38] sm:$0xff] %v448
    %465 = vst [vmem:[%s4 + $0x40] sm:$0xff] %v449
    %466 = vst [vmem:[%s4 + $0x48] sm:$0xff] %v450
    %467 = vst [vmem:[%s4 + $0x50] sm:$0xff] %v451
    %468 = vst [vmem:[%s4 + $0x58] sm:$0xff] %v452
    %469 = vst [vmem:[%s4 + $0x60] sm:$0xff] %v453
    %470 = vst [vmem:[%s4 + $0x68] sm:$0xff] %v454
    %471 = vst [vmem:[%s4 + $0x70] sm:$0xff] %v455
    %472 = vst [vmem:[%s4 + $0x78] sm:$0xff] %v456
  $region21: #{lightgcn_forward.7} parent=0 // pred_fallthru
    _
  // Predicated region
  $region22: #{lightgcn_forward.7} parent=0 // pred_check
    _
  $region23: #{lightgcn_forward.7} parent=0 // pred_check_branch
    %474 = sbr.rel (0) target = $region25
  $region24: #{lightgcn_forward.7} parent=0 // pred_region
    _
  $region25: #{lightgcn_forward.7} parent=0 // pred_fallthru
    _
  // Predicated region
  $region26: #{lightgcn_forward.7} parent=0 // pred_check
    _
  $region27: #{lightgcn_forward.7} parent=0 // pred_check_branch
    %476 = sbr.rel (0) target = $region29
  $region28: #{lightgcn_forward.7} parent=0 // pred_region
    _
  $region29: #{lightgcn_forward.7} parent=0 // pred_fallthru
    _
  // Predicated region
  $region30: #{lightgcn_forward.7} parent=0 // pred_check
    _
  $region31: #{lightgcn_forward.7} parent=0 // pred_check_branch
    %478 = sbr.rel (0) target = $region33
  $region32: #{lightgcn_forward.7} parent=0 // pred_region
    _
  $region33: #{lightgcn_forward.7} parent=0 // pred_fallthru
    _
  // Predicated region
  $region34: #{lightgcn_forward.7} parent=0 // pred_check
    _
  $region35: #{lightgcn_forward.7} parent=0 // pred_check_branch
    %480 = sbr.rel (0) target = $region37
  $region36: #{lightgcn_forward.7} parent=0 // pred_region
    _
  $region37: #{lightgcn_forward.7} parent=0 // pred_fallthru
    _

// kernel: lightgcn_forward.10
$region0: #{lightgcn_forward.10}
  #allocation0 [shape = 'u32[]', space=smem, size = 0x4, offset = 0x4, fixed_abs, tag = 'smem constant byte address 0x4 - core index']
  #allocation1 [shape = 'u32[144,128]{1,0:T(1,128)}', space=vmem, size = 0x12000, scoped, tag = 'internal scratch']
  #allocation2 [shape = 'f32[128,128]{1,0:T(8,128)}', space=vmem, size = 0x10000, scoped, tag = 'scratch operand']
  %s0 = inlined_call_operand.vmem [shape: bf16[128,128], index: 0, kind: input, shape index: {}]
  %s1 = inlined_call_operand.vmem [shape: bf16[128,128], index: 1, kind: input, shape index: {}]
  %s2 = inlined_call_operand.vmem [shape: f32[128,128], index: 2, kind: input, shape index: {}, may-alias: {2,4}]
  %s3 = inlined_call_operand.hbm [shape: bf16[128,128], index: 3, kind: output, shape index: {0}]
  %s4 = inlined_call_operand.vmem [shape: f32[128,128], index: 4, kind: output, shape index: {1}, may-alias: {2,4}]
  %5 = xla_tuple %s3, %s4
  %s6 = sld [smem:[#allocation0]]
  $region38: #{lightgcn_forward.10} parent=0
    _
  %s8 = ssub.s32 1, %s6
  %s9 = scalar_select 0, %s8, %s6
  $region1: #{lightgcn_forward.10} parent=0
    #allocation3 [shape = 'u8[32768]{0}', space=vmem, size = 0x8000, scoped, tag = 'output window, operand 0, single buffered']
    #allocation4 [shape = 's32[1]{0}', space=sflag, size = 0x4, scoped, tag = 'scoped memory for lightgcn_forward.10']
    %10 = vsyncpa [#allocation4], 0
    // Predicated region
    $region2: #{lightgcn_forward.10} parent=1 // pred_check
      _
    $region3: #{lightgcn_forward.10} parent=1 // pred_check_branch
      %12 = sbr.rel (0) target = $region5
    $region4: #{lightgcn_forward.10} parent=1 // pred_region
      _
    $region5: #{lightgcn_forward.10} parent=1 // pred_fallthru
      _
    // Predicated region
    $region6: #{lightgcn_forward.10} parent=1 // pred_check
      _
    $region7: #{lightgcn_forward.10} parent=1 // pred_check_branch
      %14 = sbr.rel (0) target = $region9
    $region8: #{lightgcn_forward.10} parent=1 // pred_region
      _
    $region9: #{lightgcn_forward.10} parent=1 // pred_fallthru
      _
    // Predicated region
    $region10: #{lightgcn_forward.10} parent=1 // pred_check
      _
    $region11: #{lightgcn_forward.10} parent=1 // pred_check_branch
      %16 = sbr.rel (0) target = $region13
    $region12: #{lightgcn_forward.10} parent=1 // pred_region
      _
    $region13: #{lightgcn_forward.10} parent=1 // pred_fallthru
      _
    %p18 = scmp.eq.s32.totalorder 0, 0
    // Predicated region
    $region14: #{lightgcn_forward.10} parent=1 // pred_check
      %p19 = pneg %p18
    $region15: #{lightgcn_forward.10} parent=1 // pred_check_branch
      %21 = sbr.rel (%p19) target = $region17
    $region16: #{lightgcn_forward.10} parent=1 // pred_region
      %22 = vst [vmem:[#allocation2] sm:$0xff] 0.0
      %23 = vst [vmem:[#allocation2 + $0x8] sm:$0xff] 0.0
      %24 = vst [vmem:[#allocation2 + $0x10] sm:$0xff] 0.0
      %25 = vst [vmem:[#allocation2 + $0x18] sm:$0xff] 0.0
      %26 = vst [vmem:[#allocation2 + $0x20] sm:$0xff] 0.0
      %27 = vst [vmem:[#allocation2 + $0x28] sm:$0xff] 0.0
      %28 = vst [vmem:[#allocation2 + $0x30] sm:$0xff] 0.0
      %29 = vst [vmem:[#allocation2 + $0x38] sm:$0xff] 0.0
      %30 = vst [vmem:[#allocation2 + $0x40] sm:$0xff] 0.0
      %31 = vst [vmem:[#allocation2 + $0x48] sm:$0xff] 0.0
      %32 = vst [vmem:[#allocation2 + $0x50] sm:$0xff] 0.0
      %33 = vst [vmem:[#allocation2 + $0x58] sm:$0xff] 0.0
      %34 = vst [vmem:[#allocation2 + $0x60] sm:$0xff] 0.0
      %35 = vst [vmem:[#allocation2 + $0x68] sm:$0xff] 0.0
      %36 = vst [vmem:[#allocation2 + $0x70] sm:$0xff] 0.0
      %37 = vst [vmem:[#allocation2 + $0x78] sm:$0xff] 0.0
    $region17: #{lightgcn_forward.10} parent=1 // pred_fallthru
      _
    %v38 = vld [vmem:[#allocation2] sm:$0xff]
    %v39 = vld [vmem:[#allocation2 + $0x8] sm:$0xff]
    %v40 = vld [vmem:[#allocation2 + $0x10] sm:$0xff]
    %v41 = vld [vmem:[#allocation2 + $0x18] sm:$0xff]
    %v42 = vld [vmem:[#allocation2 + $0x20] sm:$0xff]
    %v43 = vld [vmem:[#allocation2 + $0x28] sm:$0xff]
    %v44 = vld [vmem:[#allocation2 + $0x30] sm:$0xff]
    %v45 = vld [vmem:[#allocation2 + $0x38] sm:$0xff]
    %v46 = vld [vmem:[#allocation2 + $0x40] sm:$0xff]
    %v47 = vld [vmem:[#allocation2 + $0x48] sm:$0xff]
    %v48 = vld [vmem:[#allocation2 + $0x50] sm:$0xff]
    %v49 = vld [vmem:[#allocation2 + $0x58] sm:$0xff]
    %v50 = vld [vmem:[#allocation2 + $0x60] sm:$0xff]
    %v51 = vld [vmem:[#allocation2 + $0x68] sm:$0xff]
    %v52 = vld [vmem:[#allocation2 + $0x70] sm:$0xff]
    %v53 = vld [vmem:[#allocation2 + $0x78] sm:$0xff]
    %v54 = vld [vmem:[%s0] sm:$0xf]
    %v55 = vld [vmem:[%s0 + $0x4] sm:$0xf]
    %v56 = vld [vmem:[%s0 + $0x8] sm:$0xf]
    %v57 = vld [vmem:[%s0 + $0xc] sm:$0xf]
    %v58 = vld [vmem:[%s0 + $0x10] sm:$0xf]
    %v59 = vld [vmem:[%s0 + $0x14] sm:$0xf]
    %v60 = vld [vmem:[%s0 + $0x18] sm:$0xf]
    %v61 = vld [vmem:[%s0 + $0x1c] sm:$0xf]
    %v62 = vld [vmem:[%s0 + $0x20] sm:$0xf]
    %v63 = vld [vmem:[%s0 + $0x24] sm:$0xf]
    %v64 = vld [vmem:[%s0 + $0x28] sm:$0xf]
    %v65 = vld [vmem:[%s0 + $0x2c] sm:$0xf]
    %v66 = vld [vmem:[%s0 + $0x30] sm:$0xf]
    %v67 = vld [vmem:[%s0 + $0x34] sm:$0xf]
    %v68 = vld [vmem:[%s0 + $0x38] sm:$0xf]
    %v69 = vld [vmem:[%s0 + $0x3c] sm:$0xf]
    %v70 = vld [vmem:[%s1] sm:$0xf]
    %v71 = vld [vmem:[%s1 + $0x4] sm:$0xf]
    %v72 = vld [vmem:[%s1 + $0x8] sm:$0xf]
    %v73 = vld [vmem:[%s1 + $0xc] sm:$0xf]
    %v74 = vld [vmem:[%s1 + $0x10] sm:$0xf]
    %v75 = vld [vmem:[%s1 + $0x14] sm:$0xf]
    %v76 = vld [vmem:[%s1 + $0x18] sm:$0xf]
    %v77 = vld [vmem:[%s1 + $0x1c] sm:$0xf]
    %v78 = vld [vmem:[%s1 + $0x20] sm:$0xf]
    %v79 = vld [vmem:[%s1 + $0x24] sm:$0xf]
    %v80 = vld [vmem:[%s1 + $0x28] sm:$0xf]
    %v81 = vld [vmem:[%s1 + $0x2c] sm:$0xf]
    %v82 = vld [vmem:[%s1 + $0x30] sm:$0xf]
    %v83 = vld [vmem:[%s1 + $0x34] sm:$0xf]
    %v84 = vld [vmem:[%s1 + $0x38] sm:$0xf]
    %v85 = vld [vmem:[%s1 + $0x3c] sm:$0xf]
    %v102 = vunpack.c.l.b16 %v54
    %v103 = vunpack.c.l.b16 %v55
    %v104 = vunpack.c.l.b16 %v56
    %v105 = vunpack.c.l.b16 %v57
    %v106 = vunpack.c.l.b16 %v58
    %v107 = vunpack.c.l.b16 %v59
    %v108 = vunpack.c.l.b16 %v60
    %v109 = vunpack.c.l.b16 %v61
    %v110 = vunpack.c.l.b16 %v62
    %v111 = vunpack.c.l.b16 %v63
    %v112 = vunpack.c.l.b16 %v64
    %v113 = vunpack.c.l.b16 %v65
    %v114 = vunpack.c.l.b16 %v66
    %v115 = vunpack.c.l.b16 %v67
    %v116 = vunpack.c.l.b16 %v68
    %v117 = vunpack.c.l.b16 %v69
    %v118 = vpack.c.b16 %v103, %v102
    %v119 = vpack.c.b16 %v105, %v104
    %v120 = vpack.c.b16 %v107, %v106
    %v121 = vpack.c.b16 %v109, %v108
    %v122 = vpack.c.b16 %v111, %v110
    %v123 = vpack.c.b16 %v113, %v112
    %v124 = vpack.c.b16 %v115, %v114
    %v125 = vpack.c.b16 %v117, %v116
    %v150 = vunpack.c.l.b16 %v70
    %v151 = vunpack.c.l.b16 %v71
    %v152 = vunpack.c.l.b16 %v72
    %v153 = vunpack.c.l.b16 %v73
    %v154 = vunpack.c.l.b16 %v74
    %v155 = vunpack.c.l.b16 %v75
    %v156 = vunpack.c.l.b16 %v76
    %v157 = vunpack.c.l.b16 %v77
    %v158 = vunpack.c.l.b16 %v78
    %v159 = vunpack.c.l.b16 %v79
    %v160 = vunpack.c.l.b16 %v80
    %v161 = vunpack.c.l.b16 %v81
    %v162 = vunpack.c.l.b16 %v82
    %v163 = vunpack.c.l.b16 %v83
    %v164 = vunpack.c.l.b16 %v84
    %v165 = vunpack.c.l.b16 %v85
    %v166 = vpack.c.b16 %v151, %v150
    %v167 = vpack.c.b16 %v153, %v152
    %v168 = vpack.c.b16 %v155, %v154
    %v169 = vpack.c.b16 %v157, %v156
    %v170 = vpack.c.b16 %v159, %v158
    %v171 = vpack.c.b16 %v161, %v160
    %v172 = vpack.c.b16 %v163, %v162
    %v173 = vpack.c.b16 %v165, %v164
    %182 = vmatprep.subr.bf16.mxu0 0
    %183 = vmatpush1.bf16.msra.mxu0 %v173
    %184 = vmatprep.subr.bf16.mxu0 0
    %185 = vmatpush1.bf16.msra.mxu0 %v172
    %186 = vmatprep.subr.bf16.mxu0 0
    %187 = vmatpush1.bf16.msra.mxu0 %v171
    %188 = vmatprep.subr.bf16.mxu0 0
    %189 = vmatpush1.bf16.msra.mxu0 %v170
    %190 = vmatprep.subr.bf16.mxu0 0
    %191 = vmatpush1.bf16.msra.mxu0 %v169
    %192 = vmatprep.subr.bf16.mxu0 0
    %193 = vmatpush1.bf16.msra.mxu0 %v168
    %194 = vmatprep.subr.bf16.mxu0 0
    %195 = vmatpush1.bf16.msra.mxu0 %v167
    %196 = vmatprep.subr.bf16.mxu0 0
    %197 = vmatpush1.bf16.msra.mxu0 %v166
    %198 = vmatprep.subr.bf16.mxu0 0
    %199 = vmatpush2.bf16.msra.mxu0 0
    %200 = vmatprep.subr.bf16.mxu0 0
    %201 = vmatpush2.bf16.msra.mxu0 0
    %202 = vmatprep.subr.bf16.mxu0 0
    %203 = vmatpush2.bf16.msra.mxu0 0
    %204 = vmatprep.subr.bf16.mxu0 0
    %205 = vmatpush2.bf16.msra.mxu0 0
    %206 = vmatprep.subr.bf16.mxu0 0
    %207 = vmatpush2.bf16.msra.mxu0 0
    %208 = vmatprep.subr.bf16.mxu0 0
    %209 = vmatpush2.bf16.msra.mxu0 0
    %210 = vmatprep.subr.bf16.mxu0 0
    %211 = vmatpush2.bf16.msra.mxu0 0
    %212 = vmatprep.subr.bf16.mxu0 0
    %213 = vmatpush2.bf16.msra.mxu0 0
    %214 = vmatprep.mubr.bf16.mxu0 0
    %215 = vmatmul.mubr.bf16.gmra.mxu0 %v118
    %v216 = vpop.f32.mrf.mxu0
    %v217 = vadd.f32 0.0, %v216
    %v218 = vpop.f32.mrf.mxu0
    %v219 = vpop.f32.mrf.mxu0
    %v220 = vadd.f32 0.0, %v219
    %v221 = vpop.f32.mrf.mxu0
    %222 = vmatprep.mubr.bf16.mxu0 0
    %223 = vmatmul.mubr.bf16.gmra.mxu0 %v119
    %v224 = vpop.f32.mrf.mxu0
    %v225 = vadd.f32 0.0, %v224
    %v226 = vpop.f32.mrf.mxu0
    %v227 = vpop.f32.mrf.mxu0
    %v228 = vadd.f32 0.0, %v227
    %v229 = vpop.f32.mrf.mxu0
    %230 = vmatprep.mubr.bf16.mxu0 0
    %231 = vmatmul.mubr.bf16.gmra.mxu0 %v120
    %v232 = vpop.f32.mrf.mxu0
    %v233 = vadd.f32 0.0, %v232
    %v234 = vpop.f32.mrf.mxu0
    %v235 = vpop.f32.mrf.mxu0
    %v236 = vadd.f32 0.0, %v235
    %v237 = vpop.f32.mrf.mxu0
    %238 = vmatprep.mubr.bf16.mxu0 0
    %239 = vmatmul.mubr.bf16.gmra.mxu0 %v121
    %v240 = vpop.f32.mrf.mxu0
    %v241 = vadd.f32 0.0, %v240
    %v242 = vpop.f32.mrf.mxu0
    %v243 = vpop.f32.mrf.mxu0
    %v244 = vadd.f32 0.0, %v243
    %v245 = vpop.f32.mrf.mxu0
    %246 = vmatprep.mubr.bf16.mxu0 0
    %247 = vmatmul.mubr.bf16.gmra.mxu0 %v122
    %v248 = vpop.f32.mrf.mxu0
    %v249 = vadd.f32 0.0, %v248
    %v250 = vpop.f32.mrf.mxu0
    %v251 = vpop.f32.mrf.mxu0
    %v252 = vadd.f32 0.0, %v251
    %v253 = vpop.f32.mrf.mxu0
    %254 = vmatprep.mubr.bf16.mxu0 0
    %255 = vmatmul.mubr.bf16.gmra.mxu0 %v123
    %v256 = vpop.f32.mrf.mxu0
    %v257 = vadd.f32 0.0, %v256
    %v258 = vpop.f32.mrf.mxu0
    %v259 = vpop.f32.mrf.mxu0
    %v260 = vadd.f32 0.0, %v259
    %v261 = vpop.f32.mrf.mxu0
    %262 = vmatprep.mubr.bf16.mxu0 0
    %263 = vmatmul.mubr.bf16.gmra.mxu0 %v124
    %v264 = vpop.f32.mrf.mxu0
    %v265 = vadd.f32 0.0, %v264
    %v266 = vpop.f32.mrf.mxu0
    %v267 = vpop.f32.mrf.mxu0
    %v268 = vadd.f32 0.0, %v267
    %v269 = vpop.f32.mrf.mxu0
    %270 = vmatprep.mubr.bf16.mxu0 0
    %271 = vmatmul.mubr.bf16.gmra.mxu0 %v125
    %v272 = vpop.f32.mrf.mxu0
    %v273 = vadd.f32 0.0, %v272
    %v274 = vpop.f32.mrf.mxu0
    %v275 = vpop.f32.mrf.mxu0
    %v276 = vadd.f32 0.0, %v275
    %v277 = vpop.f32.mrf.mxu0
    %278 = vdwg.mxu0
    %v279 = vadd.f32 %v38, %v217
    %v280 = vadd.f32 %v39, %v220
    %v281 = vadd.f32 %v40, %v225
    %v282 = vadd.f32 %v41, %v228
    %v283 = vadd.f32 %v42, %v233
    %v284 = vadd.f32 %v43, %v236
    %v285 = vadd.f32 %v44, %v241
    %v286 = vadd.f32 %v45, %v244
    %v287 = vadd.f32 %v46, %v249
    %v288 = vadd.f32 %v47, %v252
    %v289 = vadd.f32 %v48, %v257
    %v290 = vadd.f32 %v49, %v260
    %v291 = vadd.f32 %v50, %v265
    %v292 = vadd.f32 %v51, %v268
    %v293 = vadd.f32 %v52, %v273
    %v294 = vadd.f32 %v53, %v276
    %295 = vst [vmem:[#allocation2] sm:$0xff] %v279
    %296 = vst [vmem:[#allocation2 + $0x8] sm:$0xff] %v280
    %297 = vst [vmem:[#allocation2 + $0x10] sm:$0xff] %v281
    %298 = vst [vmem:[#allocation2 + $0x18] sm:$0xff] %v282
    %299 = vst [vmem:[#allocation2 + $0x20] sm:$0xff] %v283
    %300 = vst [vmem:[#allocation2 + $0x28] sm:$0xff] %v284
    %301 = vst [vmem:[#allocation2 + $0x30] sm:$0xff] %v285
    %302 = vst [vmem:[#allocation2 + $0x38] sm:$0xff] %v286
    %303 = vst [vmem:[#allocation2 + $0x40] sm:$0xff] %v287
    %304 = vst [vmem:[#allocation2 + $0x48] sm:$0xff] %v288
    %305 = vst [vmem:[#allocation2 + $0x50] sm:$0xff] %v289
    %306 = vst [vmem:[#allocation2 + $0x58] sm:$0xff] %v290
    %307 = vst [vmem:[#allocation2 + $0x60] sm:$0xff] %v291
    %308 = vst [vmem:[#allocation2 + $0x68] sm:$0xff] %v292
    %309 = vst [vmem:[#allocation2 + $0x70] sm:$0xff] %v293
    %310 = vst [vmem:[#allocation2 + $0x78] sm:$0xff] %v294
    // Predicated region
    $region18: #{lightgcn_forward.10} parent=1 // pred_check
      %p311 = pneg %p18
    $region19: #{lightgcn_forward.10} parent=1 // pred_check_branch
      %313 = sbr.rel (%p311) target = $region21
    $region20: #{lightgcn_forward.10} parent=1 // pred_region
      %v314 = vld [vmem:[#allocation2] sm:$0xff]
      %v315 = vld [vmem:[#allocation2 + $0x8] sm:$0xff]
      %v316 = vld [vmem:[#allocation2 + $0x10] sm:$0xff]
      %v317 = vld [vmem:[#allocation2 + $0x18] sm:$0xff]
      %v318 = vld [vmem:[#allocation2 + $0x20] sm:$0xff]
      %v319 = vld [vmem:[#allocation2 + $0x28] sm:$0xff]
      %v320 = vld [vmem:[#allocation2 + $0x30] sm:$0xff]
      %v321 = vld [vmem:[#allocation2 + $0x38] sm:$0xff]
      %v322 = vld [vmem:[#allocation2 + $0x40] sm:$0xff]
      %v323 = vld [vmem:[#allocation2 + $0x48] sm:$0xff]
      %v324 = vld [vmem:[#allocation2 + $0x50] sm:$0xff]
      %v325 = vld [vmem:[#allocation2 + $0x58] sm:$0xff]
      %v326 = vld [vmem:[#allocation2 + $0x60] sm:$0xff]
      %v327 = vld [vmem:[#allocation2 + $0x68] sm:$0xff]
      %v328 = vld [vmem:[#allocation2 + $0x70] sm:$0xff]
      %v329 = vld [vmem:[#allocation2 + $0x78] sm:$0xff]
      %v330 = vpack.c.bf16 %v315, %v314
      %v331 = vpack.c.bf16 %v317, %v316
      %v332 = vpack.c.bf16 %v319, %v318
      %v333 = vpack.c.bf16 %v321, %v320
      %v334 = vpack.c.bf16 %v323, %v322
      %v335 = vpack.c.bf16 %v325, %v324
      %v336 = vpack.c.bf16 %v327, %v326
      %v337 = vpack.c.bf16 %v329, %v328
      %v346 = vunpack.c.l.b16 %v330
      %v347 = vunpack.c.h.b16 %v330
      %v348 = vunpack.c.l.b16 %v331
      %v349 = vunpack.c.h.b16 %v331
      %v350 = vunpack.c.l.b16 %v332
      %v351 = vunpack.c.h.b16 %v332
      %v352 = vunpack.c.l.b16 %v333
      %v353 = vunpack.c.h.b16 %v333
      %v354 = vunpack.c.l.b16 %v334
      %v355 = vunpack.c.h.b16 %v334
      %v356 = vunpack.c.l.b16 %v335
      %v357 = vunpack.c.h.b16 %v335
      %v358 = vunpack.c.l.b16 %v336
      %v359 = vunpack.c.h.b16 %v336
      %v360 = vunpack.c.l.b16 %v337
      %v361 = vunpack.c.h.b16 %v337
      %v362 = vpack.c.b16 %v346, %v346
      %v363 = vpack.c.b16 %v347, %v347
      %v364 = vpack.c.b16 %v348, %v348
      %v365 = vpack.c.b16 %v349, %v349
      %v366 = vpack.c.b16 %v350, %v350
      %v367 = vpack.c.b16 %v351, %v351
      %v368 = vpack.c.b16 %v352, %v352
      %v369 = vpack.c.b16 %v353, %v353
      %v370 = vpack.c.b16 %v354, %v354
      %v371 = vpack.c.b16 %v355, %v355
      %v372 = vpack.c.b16 %v356, %v356
      %v373 = vpack.c.b16 %v357, %v357
      %v374 = vpack.c.b16 %v358, %v358
      %v375 = vpack.c.b16 %v359, %v359
      %v376 = vpack.c.b16 %v360, %v360
      %v377 = vpack.c.b16 %v361, %v361
      %394 = vst [vmem:[#allocation3] sm:$0xf] %v362
      %395 = vst [vmem:[#allocation3 + $0x4] sm:$0xf] %v363
      %396 = vst [vmem:[#allocation3 + $0x8] sm:$0xf] %v364
      %397 = vst [vmem:[#allocation3 + $0xc] sm:$0xf] %v365
      %398 = vst [vmem:[#allocation3 + $0x10] sm:$0xf] %v366
      %399 = vst [vmem:[#allocation3 + $0x14] sm:$0xf] %v367
      %400 = vst [vmem:[#allocation3 + $0x18] sm:$0xf] %v368
      %401 = vst [vmem:[#allocation3 + $0x1c] sm:$0xf] %v369
      %402 = vst [vmem:[#allocation3 + $0x20] sm:$0xf] %v370
      %403 = vst [vmem:[#allocation3 + $0x24] sm:$0xf] %v371
      %404 = vst [vmem:[#allocation3 + $0x28] sm:$0xf] %v372
      %405 = vst [vmem:[#allocation3 + $0x2c] sm:$0xf] %v373
      %406 = vst [vmem:[#allocation3 + $0x30] sm:$0xf] %v374
      %407 = vst [vmem:[#allocation3 + $0x34] sm:$0xf] %v375
      %408 = vst [vmem:[#allocation3 + $0x38] sm:$0xf] %v376
      %409 = vst [vmem:[#allocation3 + $0x3c] sm:$0xf] %v377
      %v410 = vld [vmem:[%s2] sm:$0xff]
      %v411 = vld [vmem:[%s2 + $0x8] sm:$0xff]
      %v412 = vld [vmem:[%s2 + $0x10] sm:$0xff]
      %v413 = vld [vmem:[%s2 + $0x18] sm:$0xff]
      %v414 = vld [vmem:[%s2 + $0x20] sm:$0xff]
      %v415 = vld [vmem:[%s2 + $0x28] sm:$0xff]
      %v416 = vld [vmem:[%s2 + $0x30] sm:$0xff]
      %v417 = vld [vmem:[%s2 + $0x38] sm:$0xff]
      %v418 = vld [vmem:[%s2 + $0x40] sm:$0xff]
      %v419 = vld [vmem:[%s2 + $0x48] sm:$0xff]
      %v420 = vld [vmem:[%s2 + $0x50] sm:$0xff]
      %v421 = vld [vmem:[%s2 + $0x58] sm:$0xff]
      %v422 = vld [vmem:[%s2 + $0x60] sm:$0xff]
      %v423 = vld [vmem:[%s2 + $0x68] sm:$0xff]
      %v424 = vld [vmem:[%s2 + $0x70] sm:$0xff]
      %v425 = vld [vmem:[%s2 + $0x78] sm:$0xff]
      %v426 = vld [vmem:[#allocation2] sm:$0xff]
      %v427 = vld [vmem:[#allocation2 + $0x8] sm:$0xff]
      %v428 = vld [vmem:[#allocation2 + $0x10] sm:$0xff]
      %v429 = vld [vmem:[#allocation2 + $0x18] sm:$0xff]
      %v430 = vld [vmem:[#allocation2 + $0x20] sm:$0xff]
      %v431 = vld [vmem:[#allocation2 + $0x28] sm:$0xff]
      %v432 = vld [vmem:[#allocation2 + $0x30] sm:$0xff]
      %v433 = vld [vmem:[#allocation2 + $0x38] sm:$0xff]
      %v434 = vld [vmem:[#allocation2 + $0x40] sm:$0xff]
      %v435 = vld [vmem:[#allocation2 + $0x48] sm:$0xff]
      %v436 = vld [vmem:[#allocation2 + $0x50] sm:$0xff]
      %v437 = vld [vmem:[#allocation2 + $0x58] sm:$0xff]
      %v438 = vld [vmem:[#allocation2 + $0x60] sm:$0xff]
      %v439 = vld [vmem:[#allocation2 + $0x68] sm:$0xff]
      %v440 = vld [vmem:[#allocation2 + $0x70] sm:$0xff]
      %v441 = vld [vmem:[#allocation2 + $0x78] sm:$0xff]
      %v442 = vadd.f32 %v410, %v426
      %v443 = vadd.f32 %v411, %v427
      %v444 = vadd.f32 %v412, %v428
      %v445 = vadd.f32 %v413, %v429
      %v446 = vadd.f32 %v414, %v430
      %v447 = vadd.f32 %v415, %v431
      %v448 = vadd.f32 %v416, %v432
      %v449 = vadd.f32 %v417, %v433
      %v450 = vadd.f32 %v418, %v434
      %v451 = vadd.f32 %v419, %v435
      %v452 = vadd.f32 %v420, %v436
      %v453 = vadd.f32 %v421, %v437
      %v454 = vadd.f32 %v422, %v438
      %v455 = vadd.f32 %v423, %v439
      %v456 = vadd.f32 %v424, %v440
      %v457 = vadd.f32 %v425, %v441
      %458 = vst [vmem:[%s4] sm:$0xff] %v442
      %459 = vst [vmem:[%s4 + $0x8] sm:$0xff] %v443
      %460 = vst [vmem:[%s4 + $0x10] sm:$0xff] %v444
      %461 = vst [vmem:[%s4 + $0x18] sm:$0xff] %v445
      %462 = vst [vmem:[%s4 + $0x20] sm:$0xff] %v446
      %463 = vst [vmem:[%s4 + $0x28] sm:$0xff] %v447
      %464 = vst [vmem:[%s4 + $0x30] sm:$0xff] %v448
      %465 = vst [vmem:[%s4 + $0x38] sm:$0xff] %v449
      %466 = vst [vmem:[%s4 + $0x40] sm:$0xff] %v450
      %467 = vst [vmem:[%s4 + $0x48] sm:$0xff] %v451
      %468 = vst [vmem:[%s4 + $0x50] sm:$0xff] %v452
      %469 = vst [vmem:[%s4 + $0x58] sm:$0xff] %v453
      %470 = vst [vmem:[%s4 + $0x60] sm:$0xff] %v454
      %471 = vst [vmem:[%s4 + $0x68] sm:$0xff] %v455
      %472 = vst [vmem:[%s4 + $0x70] sm:$0xff] %v456
      %473 = vst [vmem:[%s4 + $0x78] sm:$0xff] %v457
    $region21: #{lightgcn_forward.10} parent=1 // pred_fallthru
      _
    // Predicated region
    $region22: #{lightgcn_forward.10} parent=1 // pred_check
      _
    $region23: #{lightgcn_forward.10} parent=1 // pred_check_branch
      %475 = sbr.rel (0) target = $region25
    $region24: #{lightgcn_forward.10} parent=1 // pred_region
      %s477 = ssub.s32 1024, 1024
      %478 = vsyncadd [#allocation4], %s477
      %s479 = sshll.u32 [#allocation3], 4
      %s480 = int_to_ptr.vmem [resolvable:$true] %s479
      %485 = dma.vmem_to_hbm [thread:$0]  %s480, 1024, %s3, [#allocation4], 64, 64, 4
    $region25: #{lightgcn_forward.10} parent=1 // pred_fallthru
      _
    // Predicated region
    $region26: #{lightgcn_forward.10} parent=1 // pred_check
      _
    $region27: #{lightgcn_forward.10} parent=1 // pred_check_branch
      %487 = sbr.rel (0) target = $region29
    $region28: #{lightgcn_forward.10} parent=1 // pred_region
      _
    $region29: #{lightgcn_forward.10} parent=1 // pred_fallthru
      _
    // Predicated region
    $region30: #{lightgcn_forward.10} parent=1 // pred_check
      _
    $region31: #{lightgcn_forward.10} parent=1 // pred_check_branch
      %489 = sbr.rel (0) target = $region33
    $region32: #{lightgcn_forward.10} parent=1 // pred_region
      %490 = dma.done [#allocation4], 1024
    $region33: #{lightgcn_forward.10} parent=1 // pred_fallthru
      _
    // Predicated region
    $region34: #{lightgcn_forward.10} parent=1 // pred_check
      _
    $region35: #{lightgcn_forward.10} parent=1 // pred_check_branch
      %492 = sbr.rel (0) target = $region37
    $region36: #{lightgcn_forward.10} parent=1 // pred_region
      _
    $region37: #{lightgcn_forward.10} parent=1 // pred_fallthru
      _
    %493 = vsyncpa [#allocation4], 1

</llo_original>
